<compile_context>
chip_gen: v7x
topology: tpu7x:2x2x1
jax: 0.10.0
libtpu: 0.0.40
codegen_flags: <defaults>
</compile_context>

<pallas_src>
import functools

import jax
import jax.numpy as jnp
from jax import lax
from jax.experimental import pallas as pl
from jax.experimental.pallas import tpu as pltpu


def _fused_jacreg_kernel(x_ref, w1_ref, w2t_ref, a_ref, yt_ref, r_ref, *, hh):
    """One batch tile: y^T = (tanh(x W1) W2)^T and a Jacobian-trace partial.

    x_ref   : (block_b, D)  bf16   streamed batch tile
    w1_ref  : (D, Hh)       bf16   resident, single-buffered
    w2t_ref : (C, Hh)       bf16   resident, single-buffered (W2 pre-transposed)
    a_ref   : (Hh, Hh)      f32    resident, A = (W1^T W1) ⊙ (W2 W2^T)
    yt_ref  : (C, block_b)  f32    lane-dense transposed y tile
    r_ref   : (8, 128)      f32    per-tile partial of sum_b d_b^T A d_b
    """
    # Hidden layer: bf16 operands, f32 accumulation on the MXU.
    h = jnp.tanh(jnp.dot(x_ref[...], w1_ref[...],
                         preferred_element_type=jnp.float32))        # (bb, Hh)

    # y^T = W2^T h^T, contracted over Hh (single transposed-RHS matmul), so the
    # batch dim lands on the 128-lane axis and the store is lane-dense.
    yt = lax.dot_general(w2t_ref[...], h.astype(w2t_ref.dtype),
                         (((1,), (1,)), ((), ())),
                         preferred_element_type=jnp.float32)          # (C, bb)
    yt_ref[...] = yt.astype(yt_ref.dtype)

    # Regularizer partial: d = tanh'(pre-act) = 1 - h^2 (f32),
    #   sum_b d_b^T A d_b  for this tile only.
    # Only the cheap sublane (axis-0) reduce happens in-kernel; the final
    # cross-lane reduce and the 0.5/B scaling are a tiny XLA sum in the
    # wrapper, which keeps every grid step independent (=> "parallel" axis).
    d = 1.0 - h * h
    da = jnp.dot(d, a_ref[...], preferred_element_type=jnp.float32)   # (bb, Hh)
    row = jnp.sum(da * d, axis=0, keepdims=True)                       # (1, Hh)
    r_ref[...] = jnp.zeros_like(r_ref)
    r_ref[0:1, 0:hh] = row


def _largest_divisor_leq(n, cap):
    cap = max(1, min(n, cap))
    for cand in range(cap, 0, -1):
        if n % cand == 0:
            return cand
    return 1


def _pick_block_b(B, D, Hh, C, x_itemsize, vmem_budget_bytes):
    # Bytes that scale with the batch-tile height: double-buffered x tile,
    # double-buffered y^T tile, and ~4 live f32 (block_b, Hh) intermediates.
    per_row = 2 * D * x_itemsize + 2 * C * 4 + 4 * Hh * 4
    cap_rows = max(8, vmem_budget_bytes // max(per_row, 1))
    return _largest_divisor_leq(B, min(1024, cap_rows))


def jacobian_reg_forward(x, w1, w2, *, block_b=None, compute_dtype=jnp.bfloat16):
    """Returns (y, R): y = tanh(x_flat W1) W2 and R = 0.5 tr|dy/dx|^2 (exact)."""
    B = x.shape[0]
    x_flat = x.reshape(B, -1)                 # row-major, matches torch .view(B, -1)
    D = x_flat.shape[1]
    Hh = w1.shape[1]
    C = w2.shape[1]
    assert Hh <= 128, "partial-row layout assumes Hh <= 128 (fold lanes first otherwise)"

    itemsize = jnp.dtype(compute_dtype).itemsize
    # bf16 operands for the memory-bound x stream / MXU; accumulation stays f32.
    xc = x_flat.astype(compute_dtype)
    w1c = w1.astype(compute_dtype)
    w2tc = jnp.transpose(w2.astype(compute_dtype))         # (C, Hh), consumed as-is

    # A = (W1^T W1) ⊙ (W2 W2^T): tiny Gram product from the same rounded weights
    # the kernel sees; computed once in XLA so the kernel has no init branch.
    w1f = w1c.astype(jnp.float32)
    w2f = w2tc.astype(jnp.float32)                          # (C, Hh)
    g = jnp.dot(w1f.T, w1f, precision=lax.Precision.HIGHEST)   # W1^T W1
    s = jnp.dot(w2f.T, w2f, precision=lax.Precision.HIGHEST)   # W2 W2^T
    a = (g * s).astype(jnp.float32)                         # (Hh, Hh)

    # VMEM budget / batch tile (per perf review: go beyond the old 256 cap).
    try:
        vmem_cap = int(pltpu.get_tpu_info().vmem_capacity_bytes)
    except Exception:
        vmem_cap = 64 << 20                                 # conservative (v7x)
    vmem_limit = int(min(vmem_cap // 2, 64 << 20))
    weights_bytes = D * Hh * itemsize + C * Hh * itemsize + Hh * Hh * 4
    budget = max(4 << 20, int(0.7 * vmem_limit) - weights_bytes)
    if block_b is None:
        block_b = _pick_block_b(B, D, Hh, C, itemsize, budget)
    assert B % block_b == 0, "block_b is chosen as a divisor of B"
    nb = B // block_b

    kernel = functools.partial(_fused_jacreg_kernel, hh=Hh)

    yt, r_part = pl.pallas_call(
        kernel,
        out_shape=(jax.ShapeDtypeStruct((C, B), jnp.float32),      # y^T (lane-dense)
                   jax.ShapeDtypeStruct((nb * 8, 128), jnp.float32)),  # per-tile partials
        grid_spec=pltpu.PrefetchScalarGridSpec(
            num_scalar_prefetch=0,
            grid=(nb,),
            in_specs=[
                # Streamed x tile (default double-buffered; bump to
                # pipeline_mode=pl.Buffered(3) if profiling shows exposed DMA).
                pl.BlockSpec((block_b, D), lambda i: (i, 0)),
                # Grid-invariant weights: single-buffered to save VMEM.
                pl.BlockSpec((D, Hh), lambda i: (0, 0),
                             pipeline_mode=pl.Buffered(1)),
                pl.BlockSpec((C, Hh), lambda i: (0, 0),
                             pipeline_mode=pl.Buffered(1)),
                pl.BlockSpec((Hh, Hh), lambda i: (0, 0),
                             pipeline_mode=pl.Buffered(1)),
            ],
            out_specs=(
                pl.BlockSpec((C, block_b), lambda i: (0, i)),       # y^T tile
                pl.BlockSpec((8, 128), lambda i: (i, 0)),           # partial row
            ),
        ),
        # Every grid step is now independent (per-tile partial outputs, A
        # precomputed), so the batch axis can be sharded across TensorCores.
        compiler_params=pltpu.CompilerParams(
            dimension_semantics=("parallel",),
            vmem_limit_bytes=vmem_limit),
    )(xc, w1c, w2tc, a)

    y = yt.T                                   # (B, C); tiny wrapper transpose
    r = (0.5 / B) * jnp.sum(r_part)            # final cross-tile reduce + scale
    return y, r


if __name__ == "__main__":
    key = jax.random.PRNGKey(0)
    B, C_in, H, W = 2, 4, 16, 16              # x: NCHW
    Hh, C_out = 32, 8                          # hidden width, output dim
    D = C_in * H * W

    kx, k1, k2 = jax.random.split(key, 3)
    x = jax.random.normal(kx, (B, C_in, H, W), dtype=jnp.float32)
    w1 = jax.random.normal(k1, (D, Hh), dtype=jnp.float32) / jnp.sqrt(float(D))
    w2 = jax.random.normal(k2, (Hh, C_out), dtype=jnp.float32) / jnp.sqrt(float(Hh))

    y, R = jacobian_reg_forward(x, w1, w2)
    y, R = jax.block_until_ready((y, R))

    # Reference: exact f32 autograd loop (mirrors the torch module) evaluated on
    # the same bf16-rounded operands the kernel consumes.
    xb = x.reshape(B, D).astype(jnp.bfloat16).astype(jnp.float32)
    w1b = w1.astype(jnp.bfloat16).astype(jnp.float32)
    w2b = w2.astype(jnp.bfloat16).astype(jnp.float32)

    def f(xf):
        h = jnp.tanh(jnp.dot(xf, w1b, precision=lax.Precision.HIGHEST))
        return jnp.dot(h, w2b, precision=lax.Precision.HIGHEST)

    y_ref, vjp_fn = jax.vjp(f, xb)
    J2 = 0.0
    for ii in range(C_out):
        v = jnp.zeros((B, C_out), jnp.float32).at[:, ii].set(1.0)
        (Jv,) = vjp_fn(v)
        J2 += C_out * jnp.sum(Jv * Jv) / (C_out * B)
    R_ref = 0.5 * J2

    # y uses a bf16 h for the second matmul inside the kernel -> bf16-level slack.
    assert jnp.allclose(y, y_ref, rtol=2e-2, atol=1e-2), "forward mismatch"
    assert jnp.allclose(R, R_ref, rtol=1e-2, atol=1e-6), (float(R), float(R_ref))

    print("KERNEL_OK")
</pallas_src>

<mosaic_0001>
module attributes {stable_mosaic.version = 11 : i64} {
  func.func @_fused_jacreg_kernel(%arg0: i32, %arg1: memref<2x1024xbf16, #tpu.memory_space<vmem>>, %arg2: memref<1024x32xbf16, #tpu.memory_space<vmem>>, %arg3: memref<8x32xbf16, #tpu.memory_space<vmem>>, %arg4: memref<32x32xf32, #tpu.memory_space<vmem>>, %arg5: memref<8x2xf32, #tpu.memory_space<vmem>>, %arg6: memref<8x128xf32, #tpu.memory_space<vmem>>) attributes {dimension_semantics = [#tpu.dimension_semantics<parallel>], iteration_bounds = array<i64: 1>, scalar_prefetch = 0 : i64, scratch_operands = 0 : i64, tpu.core_type = #tpu.core_type<tc>, window_params = [{transform_indices = @transform_0, window_bounds = array<i64: 2, 1024>}, {pipeline_mode = #tpu.pipeline_mode<synchronous>, transform_indices = @transform_1, window_bounds = array<i64: 1024, 32>}, {pipeline_mode = #tpu.pipeline_mode<synchronous>, transform_indices = @transform_2, window_bounds = array<i64: 8, 32>}, {pipeline_mode = #tpu.pipeline_mode<synchronous>, transform_indices = @transform_3, window_bounds = array<i64: 32, 32>}, {transform_indices = @transform_4, window_bounds = array<i64: 8, 2>}, {transform_indices = @transform_5, window_bounds = array<i64: 8, 128>}]} {
    %c0 = arith.constant 0 : index
    %c0_0 = arith.constant 0 : index
    %0 = vector.load %arg1[%c0, %c0_0] : memref<2x1024xbf16, #tpu.memory_space<vmem>>, vector<2x1024xbf16>
    %c0_1 = arith.constant 0 : index
    %c0_2 = arith.constant 0 : index
    %1 = vector.load %arg2[%c0_1, %c0_2] : memref<1024x32xbf16, #tpu.memory_space<vmem>>, vector<1024x32xbf16>
    %cst = arith.constant dense<0.000000e+00> : vector<2x32xf32>
    %2 = tpu.matmul %0, %1, %cst {dimension_numbers = #tpu.dot_dimension_numbers<[1], [0], [0], [1], [0, 0, 1, 1], [], []>} : vector<2x1024xbf16>, vector<1024x32xbf16>, vector<2x32xf32> -> vector<2x32xf32>
    %3 = math.tanh %2 : vector<2x32xf32>
    %c0_3 = arith.constant 0 : index
    %c0_4 = arith.constant 0 : index
    %4 = vector.load %arg3[%c0_3, %c0_4] : memref<8x32xbf16, #tpu.memory_space<vmem>>, vector<8x32xbf16>
    %5 = arith.truncf %3 : vector<2x32xf32> to vector<2x32xbf16>
    %cst_5 = arith.constant dense<0.000000e+00> : vector<8x2xf32>
    %6 = tpu.matmul %4, %5, %cst_5 {dimension_numbers = #tpu.dot_dimension_numbers<[1], [1], [0], [0], [0, 0, 1, 0], [], []>} : vector<8x32xbf16>, vector<2x32xbf16>, vector<8x2xf32> -> vector<8x2xf32>
    %c0_6 = arith.constant 0 : index
    %c0_7 = arith.constant 0 : index
    %7 = vector.load %arg5[%c0_6, %c0_7] : memref<8x2xf32, #tpu.memory_space<vmem>>, vector<8x2xf32>
    tpu.vector_store %arg5[%c0_6, %c0_7], %6 {strides = array<i32>} : memref<8x2xf32, #tpu.memory_space<vmem>>, vector<8x2xf32>,
    %8 = arith.mulf %3, %3 : vector<2x32xf32>
    %cst_8 = arith.constant 1.000000e+00 : f32
    %9 = vector.broadcast %cst_8 : f32 to vector<2x32xf32>
    %10 = arith.subf %9, %8 : vector<2x32xf32>
    %c0_9 = arith.constant 0 : index
    %c0_10 = arith.constant 0 : index
    %11 = vector.load %arg4[%c0_9, %c0_10] : memref<32x32xf32, #tpu.memory_space<vmem>>, vector<32x32xf32>
    %cst_11 = arith.constant dense<0.000000e+00> : vector<2x32xf32>
    %12 = tpu.matmul %10, %11, %cst_11 {dimension_numbers = #tpu.dot_dimension_numbers<[1], [0], [0], [1], [0, 0, 1, 1], [], []>} : vector<2x32xf32>, vector<32x32xf32>, vector<2x32xf32> -> vector<2x32xf32>
    %13 = arith.mulf %12, %10 : vector<2x32xf32>
    %cst_12 = arith.constant dense<0.000000e+00> : vector<32xf32>
    %14 = vector.multi_reduction <add>, %13, %cst_12 [0] : vector<2x32xf32> to vector<32xf32>
    %15 = vector.shape_cast %14 : vector<32xf32> to vector<1x32xf32>
    %cst_13 = arith.constant 0.000000e+00 : f32
    %16 = vector.broadcast %cst_13 : f32 to vector<8x128xf32>
    %c0_14 = arith.constant 0 : index
    %c0_15 = arith.constant 0 : index
    %17 = vector.load %arg6[%c0_14, %c0_15] : memref<8x128xf32, #tpu.memory_space<vmem>>, vector<8x128xf32>
    tpu.vector_store %arg6[%c0_14, %c0_15], %16 {strides = array<i32>} : memref<8x128xf32, #tpu.memory_space<vmem>>, vector<8x128xf32>,
    %c0_16 = arith.constant 0 : index
    %c0_17 = arith.constant 0 : index
    %18 = vector.load %arg6[%c0_16, %c0_17] : memref<8x128xf32, #tpu.memory_space<vmem>>, vector<1x32xf32>
    tpu.vector_store %arg6[%c0_16, %c0_17], %15 {strides = array<i32>} : memref<8x128xf32, #tpu.memory_space<vmem>>, vector<1x32xf32>,
    return
  }
  func.func @transform_0(%arg0: i32) -> (i32, i32) {
    %c0_i32 = arith.constant 0 : i32
    %c0_i32_0 = arith.constant 0 : i32
    return %arg0, %c0_i32 : i32, i32
  }
  func.func @transform_1(%arg0: i32) -> (i32, i32) {
    %c0_i32 = arith.constant 0 : i32
    %c0_i32_0 = arith.constant 0 : i32
    %c0_i32_1 = arith.constant 0 : i32
    return %c0_i32, %c0_i32_0 : i32, i32
  }
  func.func @transform_2(%arg0: i32) -> (i32, i32) {
    %c0_i32 = arith.constant 0 : i32
    %c0_i32_0 = arith.constant 0 : i32
    %c0_i32_1 = arith.constant 0 : i32
    return %c0_i32, %c0_i32_0 : i32, i32
  }
  func.func @transform_3(%arg0: i32) -> (i32, i32) {
    %c0_i32 = arith.constant 0 : i32
    %c0_i32_0 = arith.constant 0 : i32
    %c0_i32_1 = arith.constant 0 : i32
    return %c0_i32, %c0_i32_0 : i32, i32
  }
  func.func @transform_4(%arg0: i32) -> (i32, i32) {
    %c0_i32 = arith.constant 0 : i32
    %c0_i32_0 = arith.constant 0 : i32
    return %c0_i32, %arg0 : i32, i32
  }
  func.func @transform_5(%arg0: i32) -> (i32, i32) {
    %c0_i32 = arith.constant 0 : i32
    %c0_i32_0 = arith.constant 0 : i32
    return %arg0, %c0_i32 : i32, i32
  }
}

</mosaic_0001>

<llo_original>
// kernel: tpu_custom_call.1
$region0: #{tpu_custom_call.1}
  #allocation0 [shape = 'u32[]', space=smem, size = 0x4, offset = 0x4, fixed_abs, tag = 'smem constant byte address 0x4 - core index']
  #allocation1 [shape = 'u32[144,128]{1,0:T(1,128)}', space=vmem, size = 0x12000, scoped, tag = 'internal scratch']
  %s0 = inlined_call_operand.vmem [shape: bf16[2,1024], index: 0, kind: input, shape index: {}]
  %s1 = inlined_call_operand.vmem [shape: bf16[1024,32], index: 1, kind: input, shape index: {}]
  %s2 = inlined_call_operand.vmem [shape: bf16[8,32], index: 2, kind: input, shape index: {}]
  %s3 = inlined_call_operand.vmem [shape: f32[32,32], index: 3, kind: input, shape index: {}]
  %s4 = inlined_call_operand.vmem [shape: f32[8,2], index: 4, kind: output, shape index: {0}]
  %s5 = inlined_call_operand.hbm [shape: f32[8,128], index: 5, kind: output, shape index: {1}]
  %6 = xla_tuple %s4, %s5
  %s7 = sld [smem:[#allocation0]]
  $region34: #{tpu_custom_call.1} parent=0
    _
  %s9 = ssub.s32 1, %s7
  %s10 = scalar_select 0, %s9, %s7
  $region1: #{tpu_custom_call.1} parent=0
    #allocation2 [shape = 'u8[4096]{0}', space=vmem, size = 0x1000, scoped, tag = 'output window, operand 1, single buffered']
    #allocation3 [shape = 's32[1]{0}', space=sflag, size = 0x4, scoped, tag = 'scoped memory for tpu_custom_call.1']
    %11 = vsyncpa [#allocation3], 0
    // Predicated region
    $region2: #{tpu_custom_call.1} parent=1 // pred_check
      _
    $region3: #{tpu_custom_call.1} parent=1 // pred_check_branch
      %13 = sbr.rel (0) target = $region5
    $region4: #{tpu_custom_call.1} parent=1 // pred_region
      _
    $region5: #{tpu_custom_call.1} parent=1 // pred_fallthru
      _
    // Predicated region
    $region6: #{tpu_custom_call.1} parent=1 // pred_check
      _
    $region7: #{tpu_custom_call.1} parent=1 // pred_check_branch
      %15 = sbr.rel (0) target = $region9
    $region8: #{tpu_custom_call.1} parent=1 // pred_region
      _
    $region9: #{tpu_custom_call.1} parent=1 // pred_fallthru
      _
    // Predicated region
    $region10: #{tpu_custom_call.1} parent=1 // pred_check
      _
    $region11: #{tpu_custom_call.1} parent=1 // pred_check_branch
      %17 = sbr.rel (0) target = $region13
    $region12: #{tpu_custom_call.1} parent=1 // pred_region
      _
    $region13: #{tpu_custom_call.1} parent=1 // pred_fallthru
      _
    // Predicated region
    $region14: #{tpu_custom_call.1} parent=1 // pred_check
      _
    $region15: #{tpu_custom_call.1} parent=1 // pred_check_branch
      %19 = sbr.rel (0) target = $region17
    $region16: #{tpu_custom_call.1} parent=1 // pred_region
      _
    $region17: #{tpu_custom_call.1} parent=1 // pred_fallthru
      _
    %v21 = vld [vmem:[%s0] sm:$0xff]
    %v22 = vld [vmem:[%s1] sm:$0xf]
    %v23 = vld [vmem:[%s1 + $0x4] sm:$0xf]
    %v24 = vld [vmem:[%s1 + $0x8] sm:$0xf]
    %v25 = vld [vmem:[%s1 + $0xc] sm:$0xf]
    %v26 = vld [vmem:[%s1 + $0x10] sm:$0xf]
    %v27 = vld [vmem:[%s1 + $0x14] sm:$0xf]
    %v28 = vld [vmem:[%s1 + $0x18] sm:$0xf]
    %v29 = vld [vmem:[%s1 + $0x1c] sm:$0xf]
    %v30 = vld [vmem:[%s1 + $0x20] sm:$0xf]
    %v31 = vld [vmem:[%s1 + $0x24] sm:$0xf]
    %v32 = vld [vmem:[%s1 + $0x28] sm:$0xf]
    %v33 = vld [vmem:[%s1 + $0x2c] sm:$0xf]
    %v34 = vld [vmem:[%s1 + $0x30] sm:$0xf]
    %v35 = vld [vmem:[%s1 + $0x34] sm:$0xf]
    %v36 = vld [vmem:[%s1 + $0x38] sm:$0xf]
    %v37 = vld [vmem:[%s1 + $0x3c] sm:$0xf]
    %v38 = vld [vmem:[%s1 + $0x40] sm:$0xf]
    %v39 = vld [vmem:[%s1 + $0x44] sm:$0xf]
    %v40 = vld [vmem:[%s1 + $0x48] sm:$0xf]
    %v41 = vld [vmem:[%s1 + $0x4c] sm:$0xf]
    %v42 = vld [vmem:[%s1 + $0x50] sm:$0xf]
    %v43 = vld [vmem:[%s1 + $0x54] sm:$0xf]
    %v44 = vld [vmem:[%s1 + $0x58] sm:$0xf]
    %v45 = vld [vmem:[%s1 + $0x5c] sm:$0xf]
    %v46 = vld [vmem:[%s1 + $0x60] sm:$0xf]
    %v47 = vld [vmem:[%s1 + $0x64] sm:$0xf]
    %v48 = vld [vmem:[%s1 + $0x68] sm:$0xf]
    %v49 = vld [vmem:[%s1 + $0x6c] sm:$0xf]
    %v50 = vld [vmem:[%s1 + $0x70] sm:$0xf]
    %v51 = vld [vmem:[%s1 + $0x74] sm:$0xf]
    %v52 = vld [vmem:[%s1 + $0x78] sm:$0xf]
    %v53 = vld [vmem:[%s1 + $0x7c] sm:$0xf]
    %v54 = vld [vmem:[%s1 + $0x80] sm:$0xf]
    %v55 = vld [vmem:[%s1 + $0x84] sm:$0xf]
    %v56 = vld [vmem:[%s1 + $0x88] sm:$0xf]
    %v57 = vld [vmem:[%s1 + $0x8c] sm:$0xf]
    %v58 = vld [vmem:[%s1 + $0x90] sm:$0xf]
    %v59 = vld [vmem:[%s1 + $0x94] sm:$0xf]
    %v60 = vld [vmem:[%s1 + $0x98] sm:$0xf]
    %v61 = vld [vmem:[%s1 + $0x9c] sm:$0xf]
    %v62 = vld [vmem:[%s1 + $0xa0] sm:$0xf]
    %v63 = vld [vmem:[%s1 + $0xa4] sm:$0xf]
    %v64 = vld [vmem:[%s1 + $0xa8] sm:$0xf]
    %v65 = vld [vmem:[%s1 + $0xac] sm:$0xf]
    %v66 = vld [vmem:[%s1 + $0xb0] sm:$0xf]
    %v67 = vld [vmem:[%s1 + $0xb4] sm:$0xf]
    %v68 = vld [vmem:[%s1 + $0xb8] sm:$0xf]
    %v69 = vld [vmem:[%s1 + $0xbc] sm:$0xf]
    %v70 = vld [vmem:[%s1 + $0xc0] sm:$0xf]
    %v71 = vld [vmem:[%s1 + $0xc4] sm:$0xf]
    %v72 = vld [vmem:[%s1 + $0xc8] sm:$0xf]
    %v73 = vld [vmem:[%s1 + $0xcc] sm:$0xf]
    %v74 = vld [vmem:[%s1 + $0xd0] sm:$0xf]
    %v75 = vld [vmem:[%s1 + $0xd4] sm:$0xf]
    %v76 = vld [vmem:[%s1 + $0xd8] sm:$0xf]
    %v77 = vld [vmem:[%s1 + $0xdc] sm:$0xf]
    %v78 = vld [vmem:[%s1 + $0xe0] sm:$0xf]
    %v79 = vld [vmem:[%s1 + $0xe4] sm:$0xf]
    %v80 = vld [vmem:[%s1 + $0xe8] sm:$0xf]
    %v81 = vld [vmem:[%s1 + $0xec] sm:$0xf]
    %v82 = vld [vmem:[%s1 + $0xf0] sm:$0xf]
    %v83 = vld [vmem:[%s1 + $0xf4] sm:$0xf]
    %v84 = vld [vmem:[%s1 + $0xf8] sm:$0xf]
    %v85 = vld [vmem:[%s1 + $0xfc] sm:$0xf]
    %v86 = vld [vmem:[%s1 + $0x100] sm:$0xf]
    %v87 = vld [vmem:[%s1 + $0x104] sm:$0xf]
    %v88 = vld [vmem:[%s1 + $0x108] sm:$0xf]
    %v89 = vld [vmem:[%s1 + $0x10c] sm:$0xf]
    %v90 = vld [vmem:[%s1 + $0x110] sm:$0xf]
    %v91 = vld [vmem:[%s1 + $0x114] sm:$0xf]
    %v92 = vld [vmem:[%s1 + $0x118] sm:$0xf]
    %v93 = vld [vmem:[%s1 + $0x11c] sm:$0xf]
    %v94 = vld [vmem:[%s1 + $0x120] sm:$0xf]
    %v95 = vld [vmem:[%s1 + $0x124] sm:$0xf]
    %v96 = vld [vmem:[%s1 + $0x128] sm:$0xf]
    %v97 = vld [vmem:[%s1 + $0x12c] sm:$0xf]
    %v98 = vld [vmem:[%s1 + $0x130] sm:$0xf]
    %v99 = vld [vmem:[%s1 + $0x134] sm:$0xf]
    %v100 = vld [vmem:[%s1 + $0x138] sm:$0xf]
    %v101 = vld [vmem:[%s1 + $0x13c] sm:$0xf]
    %v102 = vld [vmem:[%s1 + $0x140] sm:$0xf]
    %v103 = vld [vmem:[%s1 + $0x144] sm:$0xf]
    %v104 = vld [vmem:[%s1 + $0x148] sm:$0xf]
    %v105 = vld [vmem:[%s1 + $0x14c] sm:$0xf]
    %v106 = vld [vmem:[%s1 + $0x150] sm:$0xf]
    %v107 = vld [vmem:[%s1 + $0x154] sm:$0xf]
    %v108 = vld [vmem:[%s1 + $0x158] sm:$0xf]
    %v109 = vld [vmem:[%s1 + $0x15c] sm:$0xf]
    %v110 = vld [vmem:[%s1 + $0x160] sm:$0xf]
    %v111 = vld [vmem:[%s1 + $0x164] sm:$0xf]
    %v112 = vld [vmem:[%s1 + $0x168] sm:$0xf]
    %v113 = vld [vmem:[%s1 + $0x16c] sm:$0xf]
    %v114 = vld [vmem:[%s1 + $0x170] sm:$0xf]
    %v115 = vld [vmem:[%s1 + $0x174] sm:$0xf]
    %v116 = vld [vmem:[%s1 + $0x178] sm:$0xf]
    %v117 = vld [vmem:[%s1 + $0x17c] sm:$0xf]
    %v118 = vld [vmem:[%s1 + $0x180] sm:$0xf]
    %v119 = vld [vmem:[%s1 + $0x184] sm:$0xf]
    %v120 = vld [vmem:[%s1 + $0x188] sm:$0xf]
    %v121 = vld [vmem:[%s1 + $0x18c] sm:$0xf]
    %v122 = vld [vmem:[%s1 + $0x190] sm:$0xf]
    %v123 = vld [vmem:[%s1 + $0x194] sm:$0xf]
    %v124 = vld [vmem:[%s1 + $0x198] sm:$0xf]
    %v125 = vld [vmem:[%s1 + $0x19c] sm:$0xf]
    %v126 = vld [vmem:[%s1 + $0x1a0] sm:$0xf]
    %v127 = vld [vmem:[%s1 + $0x1a4] sm:$0xf]
    %v128 = vld [vmem:[%s1 + $0x1a8] sm:$0xf]
    %v129 = vld [vmem:[%s1 + $0x1ac] sm:$0xf]
    %v130 = vld [vmem:[%s1 + $0x1b0] sm:$0xf]
    %v131 = vld [vmem:[%s1 + $0x1b4] sm:$0xf]
    %v132 = vld [vmem:[%s1 + $0x1b8] sm:$0xf]
    %v133 = vld [vmem:[%s1 + $0x1bc] sm:$0xf]
    %v134 = vld [vmem:[%s1 + $0x1c0] sm:$0xf]
    %v135 = vld [vmem:[%s1 + $0x1c4] sm:$0xf]
    %v136 = vld [vmem:[%s1 + $0x1c8] sm:$0xf]
    %v137 = vld [vmem:[%s1 + $0x1cc] sm:$0xf]
    %v138 = vld [vmem:[%s1 + $0x1d0] sm:$0xf]
    %v139 = vld [vmem:[%s1 + $0x1d4] sm:$0xf]
    %v140 = vld [vmem:[%s1 + $0x1d8] sm:$0xf]
    %v141 = vld [vmem:[%s1 + $0x1dc] sm:$0xf]
    %v142 = vld [vmem:[%s1 + $0x1e0] sm:$0xf]
    %v143 = vld [vmem:[%s1 + $0x1e4] sm:$0xf]
    %v144 = vld [vmem:[%s1 + $0x1e8] sm:$0xf]
    %v145 = vld [vmem:[%s1 + $0x1ec] sm:$0xf]
    %v146 = vld [vmem:[%s1 + $0x1f0] sm:$0xf]
    %v147 = vld [vmem:[%s1 + $0x1f4] sm:$0xf]
    %v148 = vld [vmem:[%s1 + $0x1f8] sm:$0xf]
    %v149 = vld [vmem:[%s1 + $0x1fc] sm:$0xf]
    %v151 = vcombine.high %v21, %v21
    %v153 = vunpack.c.l.s4 1966171168
    %v154 = vunpack.c.0.s8 %v153
    %v155 = vlaneseq
    %v156 = vshrl.u32 %v155, 7
    %v157 = vsub.s32 %v154, %v156
    %v158 = vrot.slane %v21, %v157
    %v160 = vunpack.c.l.s4 1966171168
    %v161 = vunpack.c.0.s8 %v160
    %v162 = vlaneseq
    %v163 = vshrl.u32 %v162, 7
    %v164 = vsub.s32 %v161, %v163
    %v165 = vrot.slane %v151, %v164
    %v166 = vcombine.high %v158, %v158
    %v167 = vcombine.high %v165, %v165
    %v169 = vunpack.c.l.s4 1966171168
    %v170 = vunpack.c.0.s8 %v169
    %v171 = vlaneseq
    %v172 = vshrl.u32 %v171, 7
    %v173 = vsub.s32 %v170, %v172
    %v174 = vrot.slane %v158, %v173
    %v176 = vunpack.c.l.s4 1966171168
    %v177 = vunpack.c.0.s8 %v176
    %v178 = vlaneseq
    %v179 = vshrl.u32 %v178, 7
    %v180 = vsub.s32 %v177, %v179
    %v181 = vrot.slane %v165, %v180
    %v183 = vunpack.c.l.s4 1966171168
    %v184 = vunpack.c.0.s8 %v183
    %v185 = vlaneseq
    %v186 = vshrl.u32 %v185, 7
    %v187 = vsub.s32 %v184, %v186
    %v188 = vrot.slane %v166, %v187
    %v190 = vunpack.c.l.s4 1966171168
    %v191 = vunpack.c.0.s8 %v190
    %v192 = vlaneseq
    %v193 = vshrl.u32 %v192, 7
    %v194 = vsub.s32 %v191, %v193
    %v195 = vrot.slane %v167, %v194
    %v196 = vcombine.high %v174, %v174
    %v197 = vcombine.high %v181, %v181
    %v198 = vcombine.high %v188, %v188
    %v199 = vcombine.high %v195, %v195
    %v336 = vunpack.c.l.b16 %v22
    %v337 = vunpack.c.l.b16 %v23
    %v338 = vunpack.c.l.b16 %v24
    %v339 = vunpack.c.l.b16 %v25
    %v340 = vunpack.c.l.b16 %v26
    %v341 = vunpack.c.l.b16 %v27
    %v342 = vunpack.c.l.b16 %v28
    %v343 = vunpack.c.l.b16 %v29
    %v344 = vunpack.c.l.b16 %v30
    %v345 = vunpack.c.l.b16 %v31
    %v346 = vunpack.c.l.b16 %v32
    %v347 = vunpack.c.l.b16 %v33
    %v348 = vunpack.c.l.b16 %v34
    %v349 = vunpack.c.l.b16 %v35
    %v350 = vunpack.c.l.b16 %v36
    %v351 = vunpack.c.l.b16 %v37
    %v352 = vunpack.c.l.b16 %v38
    %v353 = vunpack.c.l.b16 %v39
    %v354 = vunpack.c.l.b16 %v40
    %v355 = vunpack.c.l.b16 %v41
    %v356 = vunpack.c.l.b16 %v42
    %v357 = vunpack.c.l.b16 %v43
    %v358 = vunpack.c.l.b16 %v44
    %v359 = vunpack.c.l.b16 %v45
    %v360 = vunpack.c.l.b16 %v46
    %v361 = vunpack.c.l.b16 %v47
    %v362 = vunpack.c.l.b16 %v48
    %v363 = vunpack.c.l.b16 %v49
    %v364 = vunpack.c.l.b16 %v50
    %v365 = vunpack.c.l.b16 %v51
    %v366 = vunpack.c.l.b16 %v52
    %v367 = vunpack.c.l.b16 %v53
    %v368 = vunpack.c.l.b16 %v54
    %v369 = vunpack.c.l.b16 %v55
    %v370 = vunpack.c.l.b16 %v56
    %v371 = vunpack.c.l.b16 %v57
    %v372 = vunpack.c.l.b16 %v58
    %v373 = vunpack.c.l.b16 %v59
    %v374 = vunpack.c.l.b16 %v60
    %v375 = vunpack.c.l.b16 %v61
    %v376 = vunpack.c.l.b16 %v62
    %v377 = vunpack.c.l.b16 %v63
    %v378 = vunpack.c.l.b16 %v64
    %v379 = vunpack.c.l.b16 %v65
    %v380 = vunpack.c.l.b16 %v66
    %v381 = vunpack.c.l.b16 %v67
    %v382 = vunpack.c.l.b16 %v68
    %v383 = vunpack.c.l.b16 %v69
    %v384 = vunpack.c.l.b16 %v70
    %v385 = vunpack.c.l.b16 %v71
    %v386 = vunpack.c.l.b16 %v72
    %v387 = vunpack.c.l.b16 %v73
    %v388 = vunpack.c.l.b16 %v74
    %v389 = vunpack.c.l.b16 %v75
    %v390 = vunpack.c.l.b16 %v76
    %v391 = vunpack.c.l.b16 %v77
    %v392 = vunpack.c.l.b16 %v78
    %v393 = vunpack.c.l.b16 %v79
    %v394 = vunpack.c.l.b16 %v80
    %v395 = vunpack.c.l.b16 %v81
    %v396 = vunpack.c.l.b16 %v82
    %v397 = vunpack.c.l.b16 %v83
    %v398 = vunpack.c.l.b16 %v84
    %v399 = vunpack.c.l.b16 %v85
    %v400 = vunpack.c.l.b16 %v86
    %v401 = vunpack.c.l.b16 %v87
    %v402 = vunpack.c.l.b16 %v88
    %v403 = vunpack.c.l.b16 %v89
    %v404 = vunpack.c.l.b16 %v90
    %v405 = vunpack.c.l.b16 %v91
    %v406 = vunpack.c.l.b16 %v92
    %v407 = vunpack.c.l.b16 %v93
    %v408 = vunpack.c.l.b16 %v94
    %v409 = vunpack.c.l.b16 %v95
    %v410 = vunpack.c.l.b16 %v96
    %v411 = vunpack.c.l.b16 %v97
    %v412 = vunpack.c.l.b16 %v98
    %v413 = vunpack.c.l.b16 %v99
    %v414 = vunpack.c.l.b16 %v100
    %v415 = vunpack.c.l.b16 %v101
    %v416 = vunpack.c.l.b16 %v102
    %v417 = vunpack.c.l.b16 %v103
    %v418 = vunpack.c.l.b16 %v104
    %v419 = vunpack.c.l.b16 %v105
    %v420 = vunpack.c.l.b16 %v106
    %v421 = vunpack.c.l.b16 %v107
    %v422 = vunpack.c.l.b16 %v108
    %v423 = vunpack.c.l.b16 %v109
    %v424 = vunpack.c.l.b16 %v110
    %v425 = vunpack.c.l.b16 %v111
    %v426 = vunpack.c.l.b16 %v112
    %v427 = vunpack.c.l.b16 %v113
    %v428 = vunpack.c.l.b16 %v114
    %v429 = vunpack.c.l.b16 %v115
    %v430 = vunpack.c.l.b16 %v116
    %v431 = vunpack.c.l.b16 %v117
    %v432 = vunpack.c.l.b16 %v118
    %v433 = vunpack.c.l.b16 %v119
    %v434 = vunpack.c.l.b16 %v120
    %v435 = vunpack.c.l.b16 %v121
    %v436 = vunpack.c.l.b16 %v122
    %v437 = vunpack.c.l.b16 %v123
    %v438 = vunpack.c.l.b16 %v124
    %v439 = vunpack.c.l.b16 %v125
    %v440 = vunpack.c.l.b16 %v126
    %v441 = vunpack.c.l.b16 %v127
    %v442 = vunpack.c.l.b16 %v128
    %v443 = vunpack.c.l.b16 %v129
    %v444 = vunpack.c.l.b16 %v130
    %v445 = vunpack.c.l.b16 %v131
    %v446 = vunpack.c.l.b16 %v132
    %v447 = vunpack.c.l.b16 %v133
    %v448 = vunpack.c.l.b16 %v134
    %v449 = vunpack.c.l.b16 %v135
    %v450 = vunpack.c.l.b16 %v136
    %v451 = vunpack.c.l.b16 %v137
    %v452 = vunpack.c.l.b16 %v138
    %v453 = vunpack.c.l.b16 %v139
    %v454 = vunpack.c.l.b16 %v140
    %v455 = vunpack.c.l.b16 %v141
    %v456 = vunpack.c.l.b16 %v142
    %v457 = vunpack.c.l.b16 %v143
    %v458 = vunpack.c.l.b16 %v144
    %v459 = vunpack.c.l.b16 %v145
    %v460 = vunpack.c.l.b16 %v146
    %v461 = vunpack.c.l.b16 %v147
    %v462 = vunpack.c.l.b16 %v148
    %v463 = vunpack.c.l.b16 %v149
    %v464 = vpack.c.b16 %v337, %v336
    %v465 = vpack.c.b16 %v339, %v338
    %v466 = vpack.c.b16 %v341, %v340
    %v467 = vpack.c.b16 %v343, %v342
    %v468 = vpack.c.b16 %v345, %v344
    %v469 = vpack.c.b16 %v347, %v346
    %v470 = vpack.c.b16 %v349, %v348
    %v471 = vpack.c.b16 %v351, %v350
    %v472 = vpack.c.b16 %v353, %v352
    %v473 = vpack.c.b16 %v355, %v354
    %v474 = vpack.c.b16 %v357, %v356
    %v475 = vpack.c.b16 %v359, %v358
    %v476 = vpack.c.b16 %v361, %v360
    %v477 = vpack.c.b16 %v363, %v362
    %v478 = vpack.c.b16 %v365, %v364
    %v479 = vpack.c.b16 %v367, %v366
    %v480 = vpack.c.b16 %v369, %v368
    %v481 = vpack.c.b16 %v371, %v370
    %v482 = vpack.c.b16 %v373, %v372
    %v483 = vpack.c.b16 %v375, %v374
    %v484 = vpack.c.b16 %v377, %v376
    %v485 = vpack.c.b16 %v379, %v378
    %v486 = vpack.c.b16 %v381, %v380
    %v487 = vpack.c.b16 %v383, %v382
    %v488 = vpack.c.b16 %v385, %v384
    %v489 = vpack.c.b16 %v387, %v386
    %v490 = vpack.c.b16 %v389, %v388
    %v491 = vpack.c.b16 %v391, %v390
    %v492 = vpack.c.b16 %v393, %v392
    %v493 = vpack.c.b16 %v395, %v394
    %v494 = vpack.c.b16 %v397, %v396
    %v495 = vpack.c.b16 %v399, %v398
    %v496 = vpack.c.b16 %v401, %v400
    %v497 = vpack.c.b16 %v403, %v402
    %v498 = vpack.c.b16 %v405, %v404
    %v499 = vpack.c.b16 %v407, %v406
    %v500 = vpack.c.b16 %v409, %v408
    %v501 = vpack.c.b16 %v411, %v410
    %v502 = vpack.c.b16 %v413, %v412
    %v503 = vpack.c.b16 %v415, %v414
    %v504 = vpack.c.b16 %v417, %v416
    %v505 = vpack.c.b16 %v419, %v418
    %v506 = vpack.c.b16 %v421, %v420
    %v507 = vpack.c.b16 %v423, %v422
    %v508 = vpack.c.b16 %v425, %v424
    %v509 = vpack.c.b16 %v427, %v426
    %v510 = vpack.c.b16 %v429, %v428
    %v511 = vpack.c.b16 %v431, %v430
    %v512 = vpack.c.b16 %v433, %v432
    %v513 = vpack.c.b16 %v435, %v434
    %v514 = vpack.c.b16 %v437, %v436
    %v515 = vpack.c.b16 %v439, %v438
    %v516 = vpack.c.b16 %v441, %v440
    %v517 = vpack.c.b16 %v443, %v442
    %v518 = vpack.c.b16 %v445, %v444
    %v519 = vpack.c.b16 %v447, %v446
    %v520 = vpack.c.b16 %v449, %v448
    %v521 = vpack.c.b16 %v451, %v450
    %v522 = vpack.c.b16 %v453, %v452
    %v523 = vpack.c.b16 %v455, %v454
    %v524 = vpack.c.b16 %v457, %v456
    %v525 = vpack.c.b16 %v459, %v458
    %v526 = vpack.c.b16 %v461, %v460
    %v527 = vpack.c.b16 %v463, %v462
    %592 = vmatprep.subr.bf16.mxu0 0
    %593 = vmatpush1.bf16.msra.mxu0 %v464
    %594 = vmatprep.subr.bf16.mxu0 0
    %595 = vmatpush1.bf16.msra.mxu0 %v465
    %596 = vmatprep.subr.bf16.mxu0 0
    %597 = vmatpush1.bf16.msra.mxu0 %v466
    %598 = vmatprep.subr.bf16.mxu0 0
    %599 = vmatpush1.bf16.msra.mxu0 %v467
    %600 = vmatprep.subr.bf16.mxu0 0
    %601 = vmatpush1.bf16.msra.mxu0 %v468
    %602 = vmatprep.subr.bf16.mxu0 0
    %603 = vmatpush1.bf16.msra.mxu0 %v469
    %604 = vmatprep.subr.bf16.mxu0 0
    %605 = vmatpush1.bf16.msra.mxu0 %v470
    %606 = vmatprep.subr.bf16.mxu0 0
    %607 = vmatpush1.bf16.msra.mxu0 %v471
    %608 = vmatprep.subr.bf16.mxu0 0
    %609 = vmatpush1.bf16.msra.mxu0 %v472
    %610 = vmatprep.subr.bf16.mxu0 0
    %611 = vmatpush1.bf16.msra.mxu0 %v473
    %612 = vmatprep.subr.bf16.mxu0 0
    %613 = vmatpush1.bf16.msra.mxu0 %v474
    %614 = vmatprep.subr.bf16.mxu0 0
    %615 = vmatpush1.bf16.msra.mxu0 %v475
    %616 = vmatprep.subr.bf16.mxu0 0
    %617 = vmatpush1.bf16.msra.mxu0 %v476
    %618 = vmatprep.subr.bf16.mxu0 0
    %619 = vmatpush1.bf16.msra.mxu0 %v477
    %620 = vmatprep.subr.bf16.mxu0 0
    %621 = vmatpush1.bf16.msra.mxu0 %v478
    %622 = vmatprep.subr.bf16.mxu0 0
    %623 = vmatpush1.bf16.msra.mxu0 %v479
    %624 = vmatprep.mubr.bf16.mxu0 %v188
    %625 = vmatmul.mubr.bf16.gmra.mrb[0].mxu0 %v174
    %v626 = vpop.f32.mrb[0].mxu0
    %v627 = vadd.f32 0.0, %v626
    %v628 = vpop.f32.mrb[0].mxu0
    %v629 = vpop.f32.mrb[0].mxu0
    %v630 = vpop.f32.mrb[0].mxu0
    %631 = vdwg.mxu0
    %632 = vmatprep.subr.bf16.mxu0 0
    %633 = vmatpush1.bf16.msra.mxu0 %v480
    %634 = vmatprep.subr.bf16.mxu0 0
    %635 = vmatpush1.bf16.msra.mxu0 %v481
    %636 = vmatprep.subr.bf16.mxu0 0
    %637 = vmatpush1.bf16.msra.mxu0 %v482
    %638 = vmatprep.subr.bf16.mxu0 0
    %639 = vmatpush1.bf16.msra.mxu0 %v483
    %640 = vmatprep.subr.bf16.mxu0 0
    %641 = vmatpush1.bf16.msra.mxu0 %v484
    %642 = vmatprep.subr.bf16.mxu0 0
    %643 = vmatpush1.bf16.msra.mxu0 %v485
    %644 = vmatprep.subr.bf16.mxu0 0
    %645 = vmatpush1.bf16.msra.mxu0 %v486
    %646 = vmatprep.subr.bf16.mxu0 0
    %647 = vmatpush1.bf16.msra.mxu0 %v487
    %648 = vmatprep.subr.bf16.mxu0 0
    %649 = vmatpush1.bf16.msra.mxu0 %v488
    %650 = vmatprep.subr.bf16.mxu0 0
    %651 = vmatpush1.bf16.msra.mxu0 %v489
    %652 = vmatprep.subr.bf16.mxu0 0
    %653 = vmatpush1.bf16.msra.mxu0 %v490
    %654 = vmatprep.subr.bf16.mxu0 0
    %655 = vmatpush1.bf16.msra.mxu0 %v491
    %656 = vmatprep.subr.bf16.mxu0 0
    %657 = vmatpush1.bf16.msra.mxu0 %v492
    %658 = vmatprep.subr.bf16.mxu0 0
    %659 = vmatpush1.bf16.msra.mxu0 %v493
    %660 = vmatprep.subr.bf16.mxu0 0
    %661 = vmatpush1.bf16.msra.mxu0 %v494
    %662 = vmatprep.subr.bf16.mxu0 0
    %663 = vmatpush1.bf16.msra.mxu0 %v495
    %664 = vmatprep.mubr.bf16.mxu0 %v198
    %665 = vmatmul.mubr.bf16.gmra.mrb[0].mxu0 %v196
    %v666 = vpop.f32.mrb[0].mxu0
    %v667 = vadd.f32 %v627, %v666
    %v668 = vpop.f32.mrb[0].mxu0
    %v669 = vpop.f32.mrb[0].mxu0
    %v670 = vpop.f32.mrb[0].mxu0
    %671 = vdwg.mxu0
    %672 = vmatprep.subr.bf16.mxu0 0
    %673 = vmatpush1.bf16.msra.mxu0 %v496
    %674 = vmatprep.subr.bf16.mxu0 0
    %675 = vmatpush1.bf16.msra.mxu0 %v497
    %676 = vmatprep.subr.bf16.mxu0 0
    %677 = vmatpush1.bf16.msra.mxu0 %v498
    %678 = vmatprep.subr.bf16.mxu0 0
    %679 = vmatpush1.bf16.msra.mxu0 %v499
    %680 = vmatprep.subr.bf16.mxu0 0
    %681 = vmatpush1.bf16.msra.mxu0 %v500
    %682 = vmatprep.subr.bf16.mxu0 0
    %683 = vmatpush1.bf16.msra.mxu0 %v501
    %684 = vmatprep.subr.bf16.mxu0 0
    %685 = vmatpush1.bf16.msra.mxu0 %v502
    %686 = vmatprep.subr.bf16.mxu0 0
    %687 = vmatpush1.bf16.msra.mxu0 %v503
    %688 = vmatprep.subr.bf16.mxu0 0
    %689 = vmatpush1.bf16.msra.mxu0 %v504
    %690 = vmatprep.subr.bf16.mxu0 0
    %691 = vmatpush1.bf16.msra.mxu0 %v505
    %692 = vmatprep.subr.bf16.mxu0 0
    %693 = vmatpush1.bf16.msra.mxu0 %v506
    %694 = vmatprep.subr.bf16.mxu0 0
    %695 = vmatpush1.bf16.msra.mxu0 %v507
    %696 = vmatprep.subr.bf16.mxu0 0
    %697 = vmatpush1.bf16.msra.mxu0 %v508
    %698 = vmatprep.subr.bf16.mxu0 0
    %699 = vmatpush1.bf16.msra.mxu0 %v509
    %700 = vmatprep.subr.bf16.mxu0 0
    %701 = vmatpush1.bf16.msra.mxu0 %v510
    %702 = vmatprep.subr.bf16.mxu0 0
    %703 = vmatpush1.bf16.msra.mxu0 %v511
    %704 = vmatprep.mubr.bf16.mxu0 %v195
    %705 = vmatmul.mubr.bf16.gmra.mrb[0].mxu0 %v181
    %v706 = vpop.f32.mrb[0].mxu0
    %v707 = vadd.f32 %v667, %v706
    %v708 = vpop.f32.mrb[0].mxu0
    %v709 = vpop.f32.mrb[0].mxu0
    %v710 = vpop.f32.mrb[0].mxu0
    %711 = vdwg.mxu0
    %712 = vmatprep.subr.bf16.mxu0 0
    %713 = vmatpush1.bf16.msra.mxu0 %v512
    %714 = vmatprep.subr.bf16.mxu0 0
    %715 = vmatpush1.bf16.msra.mxu0 %v513
    %716 = vmatprep.subr.bf16.mxu0 0
    %717 = vmatpush1.bf16.msra.mxu0 %v514
    %718 = vmatprep.subr.bf16.mxu0 0
    %719 = vmatpush1.bf16.msra.mxu0 %v515
    %720 = vmatprep.subr.bf16.mxu0 0
    %721 = vmatpush1.bf16.msra.mxu0 %v516
    %722 = vmatprep.subr.bf16.mxu0 0
    %723 = vmatpush1.bf16.msra.mxu0 %v517
    %724 = vmatprep.subr.bf16.mxu0 0
    %725 = vmatpush1.bf16.msra.mxu0 %v518
    %726 = vmatprep.subr.bf16.mxu0 0
    %727 = vmatpush1.bf16.msra.mxu0 %v519
    %728 = vmatprep.subr.bf16.mxu0 0
    %729 = vmatpush1.bf16.msra.mxu0 %v520
    %730 = vmatprep.subr.bf16.mxu0 0
    %731 = vmatpush1.bf16.msra.mxu0 %v521
    %732 = vmatprep.subr.bf16.mxu0 0
    %733 = vmatpush1.bf16.msra.mxu0 %v522
    %734 = vmatprep.subr.bf16.mxu0 0
    %735 = vmatpush1.bf16.msra.mxu0 %v523
    %736 = vmatprep.subr.bf16.mxu0 0
    %737 = vmatpush1.bf16.msra.mxu0 %v524
    %738 = vmatprep.subr.bf16.mxu0 0
    %739 = vmatpush1.bf16.msra.mxu0 %v525
    %740 = vmatprep.subr.bf16.mxu0 0
    %741 = vmatpush1.bf16.msra.mxu0 %v526
    %742 = vmatprep.subr.bf16.mxu0 0
    %743 = vmatpush1.bf16.msra.mxu0 %v527
    %744 = vmatprep.mubr.bf16.mxu0 %v199
    %745 = vmatmul.mubr.bf16.gmra.mrb[0].mxu0 %v197
    %v746 = vpop.f32.mrb[0].mxu0
    %v747 = vadd.f32 %v707, %v746
    %v748 = vpop.f32.mrb[0].mxu0
    %v749 = vpop.f32.mrb[0].mxu0
    %v750 = vpop.f32.mrb[0].mxu0
    %751 = vdwg.mxu0
    %v752 = vtanh.pop %v747
    %v753 = vld [vmem:[%s2] sm:$0xf]
    %v754 = vpack.c.bf16 %v752, %v752
    %vm755 = vcmask 261120
    %v757 = vsel %vm755, %v753, 0
    %v760 = vsel %vm755, %v754, 0
    %762 = vmatprep.subr.bf16.mxu0 0
    %763 = vmatpush1.bf16.xpose.msra.mxu0 %v760
    %764 = vmatprep.subr.bf16.mxu0 0
    %765 = vmatpush1.bf16.xpose.msra.mxu0 0
    %766 = vmatprep.subr.bf16.mxu0 0
    %767 = vmatpush1.bf16.xpose.msra.mxu0 0
    %768 = vmatprep.subr.bf16.mxu0 0
    %769 = vmatpush1.bf16.xpose.msra.mxu0 0
    %770 = vmatprep.subr.bf16.mxu0 0
    %771 = vmatpush1.bf16.xpose.msra.mxu0 0
    %772 = vmatprep.subr.bf16.mxu0 0
    %773 = vmatpush1.bf16.xpose.msra.mxu0 0
    %774 = vmatprep.subr.bf16.mxu0 0
    %775 = vmatpush1.bf16.xpose.msra.mxu0 0
    %776 = vmatprep.subr.bf16.mxu0 0
    %777 = vmatpush1.bf16.xpose.msra.mxu0 0
    %778 = vmatprep.subr.bf16.mxu0 0
    %779 = vmatpush1.bf16.xpose.msra.mxu0 0
    %780 = vmatprep.subr.bf16.mxu0 0
    %781 = vmatpush1.bf16.xpose.msra.mxu0 0
    %782 = vmatprep.subr.bf16.mxu0 0
    %783 = vmatpush1.bf16.xpose.msra.mxu0 0
    %784 = vmatprep.subr.bf16.mxu0 0
    %785 = vmatpush1.bf16.xpose.msra.mxu0 0
    %786 = vmatprep.subr.bf16.mxu0 0
    %787 = vmatpush1.bf16.xpose.msra.mxu0 0
    %788 = vmatprep.subr.bf16.mxu0 0
    %789 = vmatpush1.bf16.xpose.msra.mxu0 0
    %790 = vmatprep.subr.bf16.mxu0 0
    %791 = vmatpush1.bf16.xpose.msra.mxu0 0
    %792 = vmatprep.subr.bf16.mxu0 0
    %793 = vmatpush1.bf16.xpose.msra.mxu0 0
    %794 = vmatprep.mubr.bf16.mxu0 0
    %795 = vmatmul.mubr.bf16.gmra.mrb[0].mxu0 %v757
    %v796 = vpop.f32.mrb[0].mxu0
    %v797 = vadd.f32 0.0, %v796
    %v798 = vpop.f32.mrb[0].mxu0
    %v799 = vpop.f32.mrb[0].mxu0
    %v800 = vpop.f32.mrb[0].mxu0
    %801 = vdwg.mxu0
    %vm802 = vcmask 15360
    %803 = vst.msk [vmem:[%s4] sm:$0xff] %vm802, %v797
    %v804 = vmul.f32 %v752, %v752
    %v805 = vsub.f32 1.0, %v804
    %v806 = vld [vmem:[%s3] sm:$0xff]
    %v807 = vld [vmem:[%s3 + $0x8] sm:$0xff]
    %v808 = vld [vmem:[%s3 + $0x10] sm:$0xff]
    %v809 = vld [vmem:[%s3 + $0x18] sm:$0xff]
    %v811 = vsel %vm755, %v805, 0
    %813 = vmatprep.subr.mxu0 0.0
    %814 = vmatpush1.msra.mxu0 %v806
    %815 = vmatprep.subr.mxu0 0.0
    %816 = vmatpush1.msra.mxu0 %v807
    %817 = vmatprep.subr.mxu0 0.0
    %818 = vmatpush1.msra.mxu0 %v808
    %819 = vmatprep.subr.mxu0 0.0
    %820 = vmatpush1.msra.mxu0 %v809
    %821 = vmatprep.subr.mxu0 0.0
    %822 = vmatpush1.msra.mxu0 0.0
    %823 = vmatprep.subr.mxu0 0.0
    %824 = vmatpush1.msra.mxu0 0.0
    %825 = vmatprep.subr.mxu0 0.0
    %826 = vmatpush1.msra.mxu0 0.0
    %827 = vmatprep.subr.mxu0 0.0
    %828 = vmatpush1.msra.mxu0 0.0
    %829 = vmatprep.subr.mxu0 0.0
    %830 = vmatpush1.msra.mxu0 0.0
    %831 = vmatprep.subr.mxu0 0.0
    %832 = vmatpush1.msra.mxu0 0.0
    %833 = vmatprep.subr.mxu0 0.0
    %834 = vmatpush1.msra.mxu0 0.0
    %835 = vmatprep.subr.mxu0 0.0
    %836 = vmatpush1.msra.mxu0 0.0
    %837 = vmatprep.subr.mxu0 0.0
    %838 = vmatpush1.msra.mxu0 0.0
    %839 = vmatprep.subr.mxu0 0.0
    %840 = vmatpush1.msra.mxu0 0.0
    %841 = vmatprep.subr.mxu0 0.0
    %842 = vmatpush1.msra.mxu0 0.0
    %843 = vmatprep.subr.mxu0 0.0
    %844 = vmatpush1.msra.mxu0 0.0
    %845 = vmatprep.subr.mxu0 0.0
    %846 = vmatpush1.msra.mxu0 0.0
    %847 = vmatprep.subr.mxu0 0.0
    %848 = vmatpush1.msra.mxu0 0.0
    %849 = vmatprep.subr.mxu0 0.0
    %850 = vmatpush1.msra.mxu0 0.0
    %851 = vmatprep.subr.mxu0 0.0
    %852 = vmatpush1.msra.mxu0 0.0
    %853 = vmatprep.subr.mxu0 0.0
    %854 = vmatpush1.msra.mxu0 0.0
    %855 = vmatprep.subr.mxu0 0.0
    %856 = vmatpush1.msra.mxu0 0.0
    %857 = vmatprep.subr.mxu0 0.0
    %858 = vmatpush1.msra.mxu0 0.0
    %859 = vmatprep.subr.mxu0 0.0
    %860 = vmatpush1.msra.mxu0 0.0
    %861 = vmatprep.subr.mxu0 0.0
    %862 = vmatpush1.msra.mxu0 0.0
    %863 = vmatprep.subr.mxu0 0.0
    %864 = vmatpush1.msra.mxu0 0.0
    %865 = vmatprep.subr.mxu0 0.0
    %866 = vmatpush1.msra.mxu0 0.0
    %867 = vmatprep.subr.mxu0 0.0
    %868 = vmatpush1.msra.mxu0 0.0
    %869 = vmatprep.subr.mxu0 0.0
    %870 = vmatpush1.msra.mxu0 0.0
    %871 = vmatprep.subr.mxu0 0.0
    %872 = vmatpush1.msra.mxu0 0.0
    %873 = vmatprep.subr.mxu0 0.0
    %874 = vmatpush1.msra.mxu0 0.0
    %875 = vmatprep.subr.mxu0 0.0
    %876 = vmatpush1.msra.mxu0 0.0
    %877 = vmatprep.mubr.f32.mxu0 0.0
    %878 = vmatmul.mubr.f32.gmra.mrb[0].mxu0 %v811
    %v879 = vpop.f32.mrb[0].mxu0
    %v880 = vadd.f32 0.0, %v879
    %v881 = vpop.f32.mrb[0].mxu0
    %882 = vdwg.mxu0
    %v883 = vmul.f32 %v880, %v805
    %vm884 = vcmask 254976
    %v885 = vsel %vm884, %v883, 0.0
    %v886 = vrot.slane %v885, 4
    %v887 = vadd.f32 %v885, %v886
    %v888 = vrot.slane %v887, 2
    %v889 = vadd.f32 %v887, %v888
    %v890 = vrot.slane %v889, 1
    %v891 = vadd.f32 %v889, %v890
    %892 = vst [vmem:[#allocation2] sm:$0xff] 0.0
    %vm893 = vcmask 253952
    %894 = vst.msk [vmem:[#allocation2] sm:$0x1] %vm893, %v891
    // Predicated region
    $region18: #{tpu_custom_call.1} parent=1 // pred_check
      _
    $region19: #{tpu_custom_call.1} parent=1 // pred_check_branch
      %896 = sbr.rel (0) target = $region21
    $region20: #{tpu_custom_call.1} parent=1 // pred_region
      _
    $region21: #{tpu_custom_call.1} parent=1 // pred_fallthru
      _
    // Predicated region
    $region22: #{tpu_custom_call.1} parent=1 // pred_check
      _
    $region23: #{tpu_custom_call.1} parent=1 // pred_check_branch
      %898 = sbr.rel (0) target = $region25
    $region24: #{tpu_custom_call.1} parent=1 // pred_region
      %s900 = ssub.s32 128, 128
      %901 = vsyncadd [#allocation3], %s900
      %s903 = sshll.u32 [#allocation2], 4
      %s904 = int_to_ptr.vmem [resolvable:$true] %s903
      %906 = dma.vmem_to_hbm [thread:$0]  %s904, 128, %s5, [#allocation3]
    $region25: #{tpu_custom_call.1} parent=1 // pred_fallthru
      _
    // Predicated region
    $region26: #{tpu_custom_call.1} parent=1 // pred_check
      _
    $region27: #{tpu_custom_call.1} parent=1 // pred_check_branch
      %908 = sbr.rel (0) target = $region29
    $region28: #{tpu_custom_call.1} parent=1 // pred_region
      _
    $region29: #{tpu_custom_call.1} parent=1 // pred_fallthru
      _
    // Predicated region
    $region30: #{tpu_custom_call.1} parent=1 // pred_check
      _
    $region31: #{tpu_custom_call.1} parent=1 // pred_check_branch
      %910 = sbr.rel (0) target = $region33
    $region32: #{tpu_custom_call.1} parent=1 // pred_region
      %911 = dma.done [#allocation3], 128
    $region33: #{tpu_custom_call.1} parent=1 // pred_fallthru
      _
    %912 = vsyncpa [#allocation3], 1

</llo_original>
